<compile_context>
chip_gen: v7x
topology: tpu7x:2x2x1
jax: 0.10.0
libtpu: 0.0.40
codegen_flags: <defaults>
</compile_context>

<pallas_src>
import jax
import jax.numpy as jnp
from jax.experimental import pallas as pl
from jax.experimental.pallas import tpu as pltpu  # noqa: F401  (TPU backend)


# ----------------------------- Pallas kernel --------------------------------
def fused_head_kernel(slab_ref, w_ref, out_ref):
    # One MXU pass: [B_pad, K_pad] @ [K_pad, C_pad] with f32 accumulation.
    out_ref[...] = jnp.dot(slab_ref[...], w_ref[...],
                           preferred_element_type=jnp.float32)


def fc_head(logits, num_excl, w1, b1, w2, b2, *, compute_dtype=jnp.bfloat16):
    """logits: [B, E] f32, num_excl: [B] f32, w1: [E+1, H], b1: [H],
    w2: [H, C], b2: [C]  ->  [B, C] f32

    Fuses concat + fc1 + (identity dropout) + fc2 into a single padded matmul.
    """
    B, E = logits.shape
    C = w2.shape[1]

    # --- algebraic fusion of the two linears (exact at inference) -----------
    w_fused = w1 @ w2                       # [E+1, C]
    b_fused = b1 @ w2 + b2                  # [C]

    # --- lane/sublane-dense padding ------------------------------------------
    K = E + 2                               # logits | excl | ones(for bias)
    K_pad = max(128, pl.cdiv(K, 128) * 128)
    C_pad = max(128, pl.cdiv(C, 128) * 128)
    B_pad = max(8, pl.cdiv(B, 8) * 8)

    # Input slab: [logits | excl | 1 | 0...], shape [B_pad, K_pad]
    slab = jnp.zeros((B_pad, K_pad), jnp.float32)
    slab = slab.at[:B, :E].set(logits.astype(jnp.float32))
    slab = slab.at[:B, E].set(num_excl.astype(jnp.float32))
    slab = slab.at[:B, E + 1].set(1.0)

    # Fused weight with bias folded in as row E+1, shape [K_pad, C_pad]
    w_pad = jnp.zeros((K_pad, C_pad), jnp.float32)
    w_pad = w_pad.at[:E + 1, :C].set(w_fused)
    w_pad = w_pad.at[E + 1, :C].set(b_fused)

    slab = slab.astype(compute_dtype)
    w_pad = w_pad.astype(compute_dtype)

    full = lambda shape: pl.BlockSpec(shape, lambda: (0, 0))
    out = pl.pallas_call(
        fused_head_kernel,
        out_shape=jax.ShapeDtypeStruct((B_pad, C_pad), jnp.float32),
        in_specs=[full((B_pad, K_pad)),      # input slab
                  full((K_pad, C_pad))],     # fused weight (+bias row)
        out_specs=full((B_pad, C_pad)),      # lane-dense output slab
    )(slab, w_pad)

    return out[:B, :C]


# --------------------------- BERT backbone stub ------------------------------
def bert_stub_logits(token_ids, emb_table, proj_w, proj_b):
    """Deterministic stand-in for BertForSequenceClassification logits.
    token_ids: [B, S] int32 -> logits [B, embed_dim] f32."""
    emb = emb_table[token_ids]                 # [B, S, d_model]
    pooled = jnp.mean(emb, axis=1)             # [B, d_model]
    return pooled @ proj_w + proj_b            # [B, embed_dim]


# --------------------------------- main --------------------------------------
if __name__ == "__main__":
    # Small shapes consistent with the module (embed_dim divisible by 8).
    B, S = 8, 8                  # batch, sequence length
    vocab = 100
    d_model = 32                 # stub backbone width
    embed_dim = 64               # BERT num_labels == embed_dim
    hidden = embed_dim // 8      # fc1 output = 8
    class_num = 4

    key = jax.random.PRNGKey(0)
    ks = jax.random.split(key, 8)

    # inputs
    x = jax.random.randint(ks[0], (B, S), 0, vocab, dtype=jnp.int32)
    num_excl = jax.random.uniform(ks[1], (B,), dtype=jnp.float32) * 5.0

    # stub BERT params
    emb_table = jax.random.normal(ks[2], (vocab, d_model), dtype=jnp.float32) * 0.02
    proj_w = jax.random.normal(ks[3], (d_model, embed_dim), dtype=jnp.float32) * 0.1
    proj_b = jnp.zeros((embed_dim,), dtype=jnp.float32)

    # FC head params (deterministic)
    w1 = jax.random.normal(ks[4], (embed_dim + 1, hidden), dtype=jnp.float32) * 0.1
    b1 = jax.random.normal(ks[5], (hidden,), dtype=jnp.float32) * 0.01
    w2 = jax.random.normal(ks[6], (hidden, class_num), dtype=jnp.float32) * 0.1
    b2 = jax.random.normal(ks[7], (class_num,), dtype=jnp.float32) * 0.01

    # forward
    logits = bert_stub_logits(x, emb_table, proj_w, proj_b)      # [B, embed_dim]
    out = fc_head(logits, num_excl, w1, b1, w2, b2)              # [B, class_num]
    out = jax.block_until_ready(out)

    # reference check (pure f32 JAX, exact same math path as the PyTorch module)
    cat = jnp.concatenate([logits, num_excl[:, None]], axis=1)
    ref = (cat @ w1 + b1) @ w2 + b2
    # Tolerance relaxed to cover the bf16 operand cast (f32 accumulation).
    assert jnp.allclose(out, ref, atol=2e-2, rtol=2e-2), "mismatch vs reference"

    print("KERNEL_OK")
</pallas_src>

<mosaic_0001>
module attributes {stable_mosaic.version = 11 : i64} {
  func.func @fused_head_kernel(%arg0: memref<8x128xbf16, #tpu.memory_space<vmem>>, %arg1: memref<128x128xbf16, #tpu.memory_space<vmem>>, %arg2: memref<8x128xf32, #tpu.memory_space<vmem>>) attributes {dimension_semantics = [], scalar_prefetch = 0 : i64, scratch_operands = 0 : i64, tpu.core_type = #tpu.core_type<tc>} {
    %c0 = arith.constant 0 : index
    %c0_0 = arith.constant 0 : index
    %0 = vector.load %arg0[%c0, %c0_0] : memref<8x128xbf16, #tpu.memory_space<vmem>>, vector<8x128xbf16>
    %c0_1 = arith.constant 0 : index
    %c0_2 = arith.constant 0 : index
    %1 = vector.load %arg1[%c0_1, %c0_2] : memref<128x128xbf16, #tpu.memory_space<vmem>>, vector<128x128xbf16>
    %cst = arith.constant dense<0.000000e+00> : vector<8x128xf32>
    %2 = tpu.matmul %0, %1, %cst {dimension_numbers = #tpu.dot_dimension_numbers<[1], [0], [0], [1], [0, 0, 1, 1], [], []>} : vector<8x128xbf16>, vector<128x128xbf16>, vector<8x128xf32> -> vector<8x128xf32>
    %c0_3 = arith.constant 0 : index
    %c0_4 = arith.constant 0 : index
    %3 = vector.load %arg2[%c0_3, %c0_4] : memref<8x128xf32, #tpu.memory_space<vmem>>, vector<8x128xf32>
    tpu.vector_store %arg2[%c0_3, %c0_4], %2 {strides = array<i32>} : memref<8x128xf32, #tpu.memory_space<vmem>>, vector<8x128xf32>,
    return
  }
}

</mosaic_0001>

<llo_original>
// kernel: tpu_custom_call.1
$region0: #{tpu_custom_call.1}
  #allocation0 [shape = 'u32[]', space=smem, size = 0x4, offset = 0x4, fixed_abs, tag = 'smem constant byte address 0x4 - core index']
  #allocation1 [shape = 'u32[144,128]{1,0:T(1,128)}', space=vmem, size = 0x12000, scoped, tag = 'internal scratch']
  %s0 = inlined_call_operand.hbm [shape: bf16[8,128], index: 0, kind: input, shape index: {}]
  %s1 = inlined_call_operand.hbm [shape: bf16[128,128], index: 1, kind: input, shape index: {}]
  %s2 = inlined_call_operand.hbm [shape: f32[8,128], index: 2, kind: output, shape index: {}]
  %s3 = sld [smem:[#allocation0]]
  $region26: #{tpu_custom_call.1} parent=0
    _
  %s5 = ssub.s32 1, %s3
  %s6 = scalar_select 0, %s5, %s3
  $region1: #{tpu_custom_call.1} parent=0
    #allocation2 [shape = 'u8[2048]{0}', space=vmem, size = 0x800, scoped, tag = 'input window, operand 0, single buffered']
    #allocation3 [shape = 's32[1]{0}', space=sflag, size = 0x4, scoped, tag = 'scoped memory for tpu_custom_call.1']
    #allocation4 [shape = 's32[1]{0}', space=sflag, size = 0x4, scoped, tag = 'scoped memory for tpu_custom_call.1']
    #allocation5 [shape = 'u8[32768]{0}', space=vmem, size = 0x8000, scoped, tag = 'input window, operand 1, single buffered']
    #allocation6 [shape = 's32[1]{0}', space=sflag, size = 0x4, scoped, tag = 'scoped memory for tpu_custom_call.1']
    #allocation7 [shape = 'u8[4096]{0}', space=vmem, size = 0x1000, scoped, tag = 'output window, operand 0, single buffered']
    %7 = vsyncpa [#allocation3], 0
    %8 = vsyncpa [#allocation6], 0
    %9 = vsyncpa [#allocation4], 0
    // Predicated region
    $region2: #{tpu_custom_call.1} parent=1 // pred_check
      _
    $region3: #{tpu_custom_call.1} parent=1 // pred_check_branch
      %11 = sbr.rel (0) target = $region5
    $region4: #{tpu_custom_call.1} parent=1 // pred_region
      %s13 = ssub.s32 64, 64
      %14 = vsyncadd [#allocation3], %s13
      %s16 = sshll.u32 [#allocation2], 4
      %s17 = int_to_ptr.vmem [resolvable:$true] %s16
      %19 = dma.hbm_to_vmem [thread:$0]  %s0, 64, %s17, [#allocation3]
    $region5: #{tpu_custom_call.1} parent=1 // pred_fallthru
      _
    // Predicated region
    $region6: #{tpu_custom_call.1} parent=1 // pred_check
      _
    $region7: #{tpu_custom_call.1} parent=1 // pred_check_branch
      %21 = sbr.rel (0) target = $region9
    $region8: #{tpu_custom_call.1} parent=1 // pred_region
      %s23 = ssub.s32 1024, 1024
      %24 = vsyncadd [#allocation6], %s23
      %s25 = sshll.u32 [#allocation5], 4
      %s26 = int_to_ptr.vmem [resolvable:$true] %s25
      %31 = dma.hbm_to_vmem [thread:$0]  %s1, 1024, %s26, [#allocation6], 64, 64, 4
    $region9: #{tpu_custom_call.1} parent=1 // pred_fallthru
      _
    // Predicated region
    $region10: #{tpu_custom_call.1} parent=1 // pred_check
      _
    $region11: #{tpu_custom_call.1} parent=1 // pred_check_branch
      %33 = sbr.rel (0) target = $region13
    $region12: #{tpu_custom_call.1} parent=1 // pred_region
      %34 = dma.done [#allocation3], 64
    $region13: #{tpu_custom_call.1} parent=1 // pred_fallthru
      _
    // Predicated region
    $region14: #{tpu_custom_call.1} parent=1 // pred_check
      _
    $region15: #{tpu_custom_call.1} parent=1 // pred_check_branch
      %36 = sbr.rel (0) target = $region17
    $region16: #{tpu_custom_call.1} parent=1 // pred_region
      %37 = dma.done [#allocation6], 1024
    $region17: #{tpu_custom_call.1} parent=1 // pred_fallthru
      _
    %v39 = vld [vmem:[#allocation2] sm:$0xf]
    %v40 = vld [vmem:[#allocation5] sm:$0xf]
    %v41 = vld [vmem:[#allocation5 + $0x4] sm:$0xf]
    %v42 = vld [vmem:[#allocation5 + $0x8] sm:$0xf]
    %v43 = vld [vmem:[#allocation5 + $0xc] sm:$0xf]
    %v44 = vld [vmem:[#allocation5 + $0x10] sm:$0xf]
    %v45 = vld [vmem:[#allocation5 + $0x14] sm:$0xf]
    %v46 = vld [vmem:[#allocation5 + $0x18] sm:$0xf]
    %v47 = vld [vmem:[#allocation5 + $0x1c] sm:$0xf]
    %v48 = vld [vmem:[#allocation5 + $0x20] sm:$0xf]
    %v49 = vld [vmem:[#allocation5 + $0x24] sm:$0xf]
    %v50 = vld [vmem:[#allocation5 + $0x28] sm:$0xf]
    %v51 = vld [vmem:[#allocation5 + $0x2c] sm:$0xf]
    %v52 = vld [vmem:[#allocation5 + $0x30] sm:$0xf]
    %v53 = vld [vmem:[#allocation5 + $0x34] sm:$0xf]
    %v54 = vld [vmem:[#allocation5 + $0x38] sm:$0xf]
    %v55 = vld [vmem:[#allocation5 + $0x3c] sm:$0xf]
    %v72 = vunpack.c.l.b16 %v40
    %v73 = vunpack.c.l.b16 %v41
    %v74 = vunpack.c.l.b16 %v42
    %v75 = vunpack.c.l.b16 %v43
    %v76 = vunpack.c.l.b16 %v44
    %v77 = vunpack.c.l.b16 %v45
    %v78 = vunpack.c.l.b16 %v46
    %v79 = vunpack.c.l.b16 %v47
    %v80 = vunpack.c.l.b16 %v48
    %v81 = vunpack.c.l.b16 %v49
    %v82 = vunpack.c.l.b16 %v50
    %v83 = vunpack.c.l.b16 %v51
    %v84 = vunpack.c.l.b16 %v52
    %v85 = vunpack.c.l.b16 %v53
    %v86 = vunpack.c.l.b16 %v54
    %v87 = vunpack.c.l.b16 %v55
    %v88 = vpack.c.b16 %v73, %v72
    %v89 = vpack.c.b16 %v75, %v74
    %v90 = vpack.c.b16 %v77, %v76
    %v91 = vpack.c.b16 %v79, %v78
    %v92 = vpack.c.b16 %v81, %v80
    %v93 = vpack.c.b16 %v83, %v82
    %v94 = vpack.c.b16 %v85, %v84
    %v95 = vpack.c.b16 %v87, %v86
    %104 = vmatprep.subr.bf16.mxu0 0
    %105 = vmatpush1.bf16.msra.mxu0 %v88
    %106 = vmatprep.subr.bf16.mxu0 0
    %107 = vmatpush1.bf16.msra.mxu0 %v89
    %108 = vmatprep.subr.bf16.mxu0 0
    %109 = vmatpush1.bf16.msra.mxu0 %v90
    %110 = vmatprep.subr.bf16.mxu0 0
    %111 = vmatpush1.bf16.msra.mxu0 %v91
    %112 = vmatprep.subr.bf16.mxu0 0
    %113 = vmatpush1.bf16.msra.mxu0 %v92
    %114 = vmatprep.subr.bf16.mxu0 0
    %115 = vmatpush1.bf16.msra.mxu0 %v93
    %116 = vmatprep.subr.bf16.mxu0 0
    %117 = vmatpush1.bf16.msra.mxu0 %v94
    %118 = vmatprep.subr.bf16.mxu0 0
    %119 = vmatpush1.bf16.msra.mxu0 %v95
    %120 = vmatprep.subr.bf16.mxu0 0
    %121 = vmatpush1.bf16.msra.mxu0 0
    %122 = vmatprep.subr.bf16.mxu0 0
    %123 = vmatpush1.bf16.msra.mxu0 0
    %124 = vmatprep.subr.bf16.mxu0 0
    %125 = vmatpush1.bf16.msra.mxu0 0
    %126 = vmatprep.subr.bf16.mxu0 0
    %127 = vmatpush1.bf16.msra.mxu0 0
    %128 = vmatprep.subr.bf16.mxu0 0
    %129 = vmatpush1.bf16.msra.mxu0 0
    %130 = vmatprep.subr.bf16.mxu0 0
    %131 = vmatpush1.bf16.msra.mxu0 0
    %132 = vmatprep.subr.bf16.mxu0 0
    %133 = vmatpush1.bf16.msra.mxu0 0
    %134 = vmatprep.subr.bf16.mxu0 0
    %135 = vmatpush1.bf16.msra.mxu0 0
    %136 = vmatprep.mubr.bf16.mxu0 0
    %137 = vmatmul.mubr.bf16.gmra.mrb[0].mxu0 %v39
    %v138 = vpop.f32.mrb[0].mxu0
    %v139 = vadd.f32 0.0, %v138
    %v140 = vpop.f32.mrb[0].mxu0
    %v141 = vpop.f32.mrb[0].mxu0
    %v142 = vpop.f32.mrb[0].mxu0
    %143 = vdwg.mxu0
    %144 = vst [vmem:[#allocation7] sm:$0xff] %v139
    // Predicated region
    $region18: #{tpu_custom_call.1} parent=1 // pred_check
      _
    $region19: #{tpu_custom_call.1} parent=1 // pred_check_branch
      %146 = sbr.rel (0) target = $region21
    $region20: #{tpu_custom_call.1} parent=1 // pred_region
      %s148 = ssub.s32 128, 128
      %149 = vsyncadd [#allocation4], %s148
      %s151 = sshll.u32 [#allocation7], 4
      %s152 = int_to_ptr.vmem [resolvable:$true] %s151
      %154 = dma.vmem_to_hbm [thread:$0]  %s152, 128, %s2, [#allocation4]
    $region21: #{tpu_custom_call.1} parent=1 // pred_fallthru
      _
    // Predicated region
    $region22: #{tpu_custom_call.1} parent=1 // pred_check
      _
    $region23: #{tpu_custom_call.1} parent=1 // pred_check_branch
      %156 = sbr.rel (0) target = $region25
    $region24: #{tpu_custom_call.1} parent=1 // pred_region
      %157 = dma.done [#allocation4], 128
    $region25: #{tpu_custom_call.1} parent=1 // pred_fallthru
      _
    %158 = vsyncpa [#allocation3], 1
    %159 = vsyncpa [#allocation6], 1
    %160 = vsyncpa [#allocation4], 1

</llo_original>
